<compile_context>
chip_gen: v5e
topology: v5e:2x2
jax: 0.10.0
libtpu: 0.0.40
codegen_flags: <defaults>
</compile_context>

<pallas_src>
import functools

import jax
import jax.numpy as jnp
from jax import lax
from jax.experimental import pallas as pl
from jax.experimental.pallas import tpu as pltpu

LRELU_SLOPE = 0.2
LANE = 128
SUBLANE = 8


def _round_up(x, m):
    return (x + m - 1) // m * m


def _cdiv(a, b):
    return (a + b - 1) // b


# ----------------------------------------------------------------------------
# Pallas kernel: in-VMEM im2col (9 lane-shifted taps) -> 9 accumulated MXU
# matmuls (f32 acc) -> +bias -> tanh.  LeakyReLU already applied in wrapper.
# ----------------------------------------------------------------------------
def _torgb_kernel(x1_ref, x2_ref, w_ref, b_ref, o_ref, *, wp, f_off):
    # x1_ref/x2_ref: (1, Cin_p, T) bf16 — lane-tiles t and t+1 of the
    #                leaky-relu'd, spatially zero-padded, flattened input.
    # w_ref:         (9, Cout_p, Cin_p) bf16 — per-tap conv weight, Cout->8.
    # b_ref:         (Cout_p, 1) f32 — conv bias, Cout padded to 8.
    # o_ref:         (1, Cout_p, T) f32 — tanh(conv) on the padded grid.
    cout_p, t = o_ref.shape[1], o_ref.shape[2]
    x = jnp.concatenate([x1_ref[0], x2_ref[0]], axis=-1)        # (Cin_p, 2T) bf16
    acc = jnp.zeros((cout_p, t), jnp.float32)
    for tap in range(9):                                        # unrolled at trace time
        di, dj = tap // 3, tap % 3
        start = f_off + (di - 1) * wp + (dj - 1)                # static lane shift
        acc = acc + jnp.dot(w_ref[tap], x[:, start:start + t],  # bf16 MXU, f32 acc
                            preferred_element_type=jnp.float32)
    acc = acc + b_ref[...]                                      # (Cout_p, 1) broadcast
    o_ref[0] = jnp.tanh(acc).astype(o_ref.dtype)                # EUP tanh


# ----------------------------------------------------------------------------
# Wrapper: relu once -> pad/flatten -> bf16 -> pallas_call -> crop borders.
# ----------------------------------------------------------------------------
@functools.partial(jax.jit, static_argnames=("block_hw",))
def torgb_forward(x_nchw, w_conv, b_conv, *, block_hw=1024):
    """ToRGB forward: tanh(conv3x3(leaky_relu(x, 0.2)) + b). NCHW f32 in/out."""
    n, cin, h, w = x_nchw.shape
    cout = w_conv.shape[0]
    wp = w + 2                                    # padded row width
    l_flat = (h + 2) * wp                         # flattened padded grid length
    cin_p = _round_up(cin, SUBLANE)               # contraction dim, sublane aligned
    cout_p = _round_up(max(cout, SUBLANE), SUBLANE)

    # ---- spatial (lane) tile size ----
    t_min = max(LANE, _round_up(2 * (wp + 1), LANE))       # must hold the +/-(W+3) halo
    tiles_target = max(1, (8 + n - 1) // n)                # aim for >= ~8 grid steps (2 TCs + pipeline)
    t_fit = _round_up(_cdiv(l_flat, tiles_target), LANE)
    t_lanes = max(t_min, min(_round_up(block_hw, LANE), t_fit))

    # Generation-aware VMEM budget (v7x has 64 MiB/TC vs 128 MiB on v5e/v6e).
    try:
        vmem_cap = int(pltpu.get_tpu_info().vmem_capacity_bytes)
    except Exception:
        vmem_cap = 64 << 20
    vmem_budget = min(vmem_cap // 2, 32 << 20)

    def _vmem_est(t):
        stream_in = 2 * 2 * cin_p * t * 2         # two x windows, double-buffered, bf16
        stream_out = 2 * cout_p * t * 4           # output tile, double-buffered, f32
        scratch = 6 * cin_p * t * 2 + cout_p * t * 4  # concat + live shifted slices + acc
        return stream_in + stream_out + scratch + (1 << 16)

    while _vmem_est(t_lanes) > (3 * vmem_budget) // 4 and t_lanes > t_min:
        new_t = max(t_min, _round_up(t_lanes // 2, LANE))
        if new_t == t_lanes:
            break
        t_lanes = new_t

    n_t = _cdiv(l_flat, t_lanes)
    # Left-halo offset of the output window inside the concatenated 2T buffer.
    f_off = min(_round_up(wp + 1, SUBLANE), t_lanes - (wp + 1))
    assert wp + 1 <= f_off <= t_lanes - (wp + 1)
    l_ext = (n_t + 1) * t_lanes                   # +1 tile: (t, t+1) window never runs off

    # ---- input prep (single fused XLA pass): relu in f32, pad, flatten, bf16 ----
    act = jnp.where(x_nchw > 0, x_nchw, LRELU_SLOPE * x_nchw)       # LeakyReLU once on x
    act = jnp.pad(act, ((0, 0), (0, 0), (1, 1), (1, 1)))            # conv zero padding
    act = act.reshape(n, cin, l_flat)
    x_ext = jnp.pad(act, ((0, 0), (0, cin_p - cin),
                          (f_off, l_ext - f_off - l_flat)))
    x_ext = x_ext.astype(jnp.bfloat16)                              # halve HBM traffic

    # Conv weight (Cout, Cin, 3, 3) -> (9, Cout_p, Cin_p): tap-major, Cout on sublanes.
    w9 = jnp.transpose(w_conv, (2, 3, 0, 1)).reshape(9, cout, cin)
    w9 = jnp.pad(w9, ((0, 0), (0, cout_p - cout), (0, cin_p - cin))).astype(jnp.bfloat16)
    b_pad = jnp.pad(b_conv.astype(jnp.float32), (0, cout_p - cout)).reshape(cout_p, 1)

    vmem_limit = int(min(max(2 * _vmem_est(t_lanes), 4 << 20), vmem_budget))
    hw_out = n_t * t_lanes
    cost = pl.CostEstimate(
        flops=2 * n * hw_out * 9 * cin_p * cout_p,
        transcendentals=n * hw_out * cout_p,
        bytes_accessed=(2 * x_ext.size * 2          # each x element streamed twice (bf16)
                        + w9.size * 2 + b_pad.size * 4
                        + n * cout_p * hw_out * 4),
    )

    kernel = functools.partial(_torgb_kernel, wp=wp, f_off=f_off)
    out = pl.pallas_call(
        kernel,
        out_shape=jax.ShapeDtypeStruct((n, cout_p, hw_out), jnp.float32),
        grid_spec=pltpu.PrefetchScalarGridSpec(
            num_scalar_prefetch=0,
            grid=(n, n_t),
            in_specs=[
                pl.BlockSpec((1, cin_p, t_lanes), lambda b, t: (b, 0, t)),
                pl.BlockSpec((1, cin_p, t_lanes), lambda b, t: (b, 0, t + 1)),
                pl.BlockSpec((9, cout_p, cin_p), lambda b, t: (0, 0, 0)),
                pl.BlockSpec((cout_p, 1), lambda b, t: (0, 0)),
            ],
            out_specs=pl.BlockSpec((1, cout_p, t_lanes), lambda b, t: (b, 0, t)),
        ),
        compiler_params=pltpu.CompilerParams(
            dimension_semantics=("parallel", "parallel"),
            vmem_limit_bytes=vmem_limit),
        cost_estimate=cost,
    )(x_ext, x_ext, w9, b_pad)

    # Crop padded-grid borders / tile tail; already channel-major (NCHW).
    out = out[:, :cout, :l_flat].reshape(n, cout, h + 2, w + 2)
    return out[:, :, 1:h + 1, 1:w + 1]


# ----------------------------------------------------------------------------
# Pure-JAX f32 reference for correctness
# ----------------------------------------------------------------------------
def _reference(x_nchw, w_conv, b_conv):
    act = jnp.where(x_nchw > 0, x_nchw, LRELU_SLOPE * x_nchw)
    conv = lax.conv_general_dilated(
        act, w_conv, window_strides=(1, 1), padding=((1, 1), (1, 1)),
        dimension_numbers=("NCHW", "OIHW", "NCHW"))
    conv = conv + b_conv.reshape(1, -1, 1, 1)
    return jnp.tanh(conv)


if __name__ == "__main__":
    # Small shapes consistent with the module: N=2, in_channels=4, H=W=16, out_channels=3.
    N, CIN, H, W = 2, 4, 16, 16
    COUT = 3

    key = jax.random.PRNGKey(0)
    kx, kw, kb = jax.random.split(key, 3)

    x = jax.random.normal(kx, (N, CIN, H, W), dtype=jnp.float32)
    # Conv2d-like deterministic init: uniform(-1/sqrt(fan_in), 1/sqrt(fan_in)).
    fan_in = CIN * 3 * 3
    bound = 1.0 / (fan_in ** 0.5)
    w_conv = jax.random.uniform(kw, (COUT, CIN, 3, 3), jnp.float32, -bound, bound)
    b_conv = jax.random.uniform(kb, (COUT,), jnp.float32, -bound, bound)

    out = jax.block_until_ready(torgb_forward(x, w_conv, b_conv))
    ref = jax.block_until_ready(_reference(x, w_conv, b_conv))

    assert out.shape == (N, COUT, H, W), out.shape
    err = float(jnp.max(jnp.abs(out - ref)))
    # bf16 MXU operands vs f32 reference -> loosened tolerance.
    assert err < 2e-2, err

    print("KERNEL_OK")
</pallas_src>

<mosaic_0001>
module attributes {stable_mosaic.version = 11 : i64} {
  func.func @_torgb_kernel(%arg0: i32, %arg1: i32, %arg2: memref<1x8x128xbf16, #tpu.memory_space<vmem>>, %arg3: memref<1x8x128xbf16, #tpu.memory_space<vmem>>, %arg4: memref<9x8x8xbf16, #tpu.memory_space<vmem>>, %arg5: memref<8x1xf32, #tpu.memory_space<vmem>>, %arg6: memref<1x8x128xf32, #tpu.memory_space<vmem>>) attributes {dimension_semantics = [#tpu.dimension_semantics<parallel>, #tpu.dimension_semantics<parallel>], iteration_bounds = array<i64: 2, 3>, scalar_prefetch = 0 : i64, scratch_operands = 0 : i64, tpu.core_type = #tpu.core_type<tc>, window_params = [{transform_indices = @transform_0, window_bounds = array<i64: 1, 8, 128>}, {transform_indices = @transform_1, window_bounds = array<i64: 1, 8, 128>}, {pipeline_mode = #tpu.pipeline_mode<synchronous>, transform_indices = @transform_2, window_bounds = array<i64: 9, 8, 8>}, {pipeline_mode = #tpu.pipeline_mode<synchronous>, transform_indices = @transform_3, window_bounds = array<i64: 8, 1>}, {transform_indices = @transform_4, window_bounds = array<i64: 1, 8, 128>}]} {
    %c0 = arith.constant 0 : index
    %c0_0 = arith.constant 0 : index
    %c0_1 = arith.constant 0 : index
    %0 = vector.load %arg2[%c0, %c0_0, %c0_1] : memref<1x8x128xbf16, #tpu.memory_space<vmem>>, vector<1x8x128xbf16>
    %1 = vector.shape_cast %0 : vector<1x8x128xbf16> to vector<8x128xbf16>
    %c0_2 = arith.constant 0 : index
    %c0_3 = arith.constant 0 : index
    %c0_4 = arith.constant 0 : index
    %2 = vector.load %arg3[%c0_2, %c0_3, %c0_4] : memref<1x8x128xbf16, #tpu.memory_space<vmem>>, vector<1x8x128xbf16>
    %3 = vector.shape_cast %2 : vector<1x8x128xbf16> to vector<8x128xbf16>
    %4 = tpu.concatenate %1, %3 in 1 : vector<8x128xbf16>, vector<8x128xbf16> -> vector<8x256xbf16>
    %cst = arith.constant 0.000000e+00 : f32
    %5 = vector.broadcast %cst : f32 to vector<8x128xf32>
    %c0_5 = arith.constant 0 : index
    %c0_6 = arith.constant 0 : index
    %c0_7 = arith.constant 0 : index
    %6 = vector.load %arg4[%c0_5, %c0_6, %c0_7] : memref<9x8x8xbf16, #tpu.memory_space<vmem>>, vector<1x8x8xbf16>
    %7 = vector.shape_cast %6 : vector<1x8x8xbf16> to vector<8x8xbf16>
    %8 = vector.extract_strided_slice %4 {offsets = [0, 5], sizes = [8, 128], strides = [1, 1]} : vector<8x256xbf16> to vector<8x128xbf16>
    %cst_8 = arith.constant dense<0.000000e+00> : vector<8x128xf32>
    %9 = tpu.matmul %7, %8, %cst_8 {dimension_numbers = #tpu.dot_dimension_numbers<[1], [0], [0], [1], [0, 0, 1, 1], [], []>} : vector<8x8xbf16>, vector<8x128xbf16>, vector<8x128xf32> -> vector<8x128xf32>
    %10 = arith.addf %5, %9 : vector<8x128xf32>
    %c1 = arith.constant 1 : index
    %c0_9 = arith.constant 0 : index
    %c0_10 = arith.constant 0 : index
    %11 = vector.load %arg4[%c1, %c0_9, %c0_10] : memref<9x8x8xbf16, #tpu.memory_space<vmem>>, vector<1x8x8xbf16>
    %12 = vector.shape_cast %11 : vector<1x8x8xbf16> to vector<8x8xbf16>
    %13 = vector.extract_strided_slice %4 {offsets = [0, 6], sizes = [8, 128], strides = [1, 1]} : vector<8x256xbf16> to vector<8x128xbf16>
    %cst_11 = arith.constant dense<0.000000e+00> : vector<8x128xf32>
    %14 = tpu.matmul %12, %13, %cst_11 {dimension_numbers = #tpu.dot_dimension_numbers<[1], [0], [0], [1], [0, 0, 1, 1], [], []>} : vector<8x8xbf16>, vector<8x128xbf16>, vector<8x128xf32> -> vector<8x128xf32>
    %15 = arith.addf %10, %14 : vector<8x128xf32>
    %c2 = arith.constant 2 : index
    %c0_12 = arith.constant 0 : index
    %c0_13 = arith.constant 0 : index
    %16 = vector.load %arg4[%c2, %c0_12, %c0_13] : memref<9x8x8xbf16, #tpu.memory_space<vmem>>, vector<1x8x8xbf16>
    %17 = vector.shape_cast %16 : vector<1x8x8xbf16> to vector<8x8xbf16>
    %18 = vector.extract_strided_slice %4 {offsets = [0, 7], sizes = [8, 128], strides = [1, 1]} : vector<8x256xbf16> to vector<8x128xbf16>
    %cst_14 = arith.constant dense<0.000000e+00> : vector<8x128xf32>
    %19 = tpu.matmul %17, %18, %cst_14 {dimension_numbers = #tpu.dot_dimension_numbers<[1], [0], [0], [1], [0, 0, 1, 1], [], []>} : vector<8x8xbf16>, vector<8x128xbf16>, vector<8x128xf32> -> vector<8x128xf32>
    %20 = arith.addf %15, %19 : vector<8x128xf32>
    %c3 = arith.constant 3 : index
    %c0_15 = arith.constant 0 : index
    %c0_16 = arith.constant 0 : index
    %21 = vector.load %arg4[%c3, %c0_15, %c0_16] : memref<9x8x8xbf16, #tpu.memory_space<vmem>>, vector<1x8x8xbf16>
    %22 = vector.shape_cast %21 : vector<1x8x8xbf16> to vector<8x8xbf16>
    %23 = vector.extract_strided_slice %4 {offsets = [0, 23], sizes = [8, 128], strides = [1, 1]} : vector<8x256xbf16> to vector<8x128xbf16>
    %cst_17 = arith.constant dense<0.000000e+00> : vector<8x128xf32>
    %24 = tpu.matmul %22, %23, %cst_17 {dimension_numbers = #tpu.dot_dimension_numbers<[1], [0], [0], [1], [0, 0, 1, 1], [], []>} : vector<8x8xbf16>, vector<8x128xbf16>, vector<8x128xf32> -> vector<8x128xf32>
    %25 = arith.addf %20, %24 : vector<8x128xf32>
    %c4 = arith.constant 4 : index
    %c0_18 = arith.constant 0 : index
    %c0_19 = arith.constant 0 : index
    %26 = vector.load %arg4[%c4, %c0_18, %c0_19] : memref<9x8x8xbf16, #tpu.memory_space<vmem>>, vector<1x8x8xbf16>
    %27 = vector.shape_cast %26 : vector<1x8x8xbf16> to vector<8x8xbf16>
    %28 = vector.extract_strided_slice %4 {offsets = [0, 24], sizes = [8, 128], strides = [1, 1]} : vector<8x256xbf16> to vector<8x128xbf16>
    %cst_20 = arith.constant dense<0.000000e+00> : vector<8x128xf32>
    %29 = tpu.matmul %27, %28, %cst_20 {dimension_numbers = #tpu.dot_dimension_numbers<[1], [0], [0], [1], [0, 0, 1, 1], [], []>} : vector<8x8xbf16>, vector<8x128xbf16>, vector<8x128xf32> -> vector<8x128xf32>
    %30 = arith.addf %25, %29 : vector<8x128xf32>
    %c5 = arith.constant 5 : index
    %c0_21 = arith.constant 0 : index
    %c0_22 = arith.constant 0 : index
    %31 = vector.load %arg4[%c5, %c0_21, %c0_22] : memref<9x8x8xbf16, #tpu.memory_space<vmem>>, vector<1x8x8xbf16>
    %32 = vector.shape_cast %31 : vector<1x8x8xbf16> to vector<8x8xbf16>
    %33 = vector.extract_strided_slice %4 {offsets = [0, 25], sizes = [8, 128], strides = [1, 1]} : vector<8x256xbf16> to vector<8x128xbf16>
    %cst_23 = arith.constant dense<0.000000e+00> : vector<8x128xf32>
    %34 = tpu.matmul %32, %33, %cst_23 {dimension_numbers = #tpu.dot_dimension_numbers<[1], [0], [0], [1], [0, 0, 1, 1], [], []>} : vector<8x8xbf16>, vector<8x128xbf16>, vector<8x128xf32> -> vector<8x128xf32>
    %35 = arith.addf %30, %34 : vector<8x128xf32>
    %c6 = arith.constant 6 : index
    %c0_24 = arith.constant 0 : index
    %c0_25 = arith.constant 0 : index
    %36 = vector.load %arg4[%c6, %c0_24, %c0_25] : memref<9x8x8xbf16, #tpu.memory_space<vmem>>, vector<1x8x8xbf16>
    %37 = vector.shape_cast %36 : vector<1x8x8xbf16> to vector<8x8xbf16>
    %38 = vector.extract_strided_slice %4 {offsets = [0, 41], sizes = [8, 128], strides = [1, 1]} : vector<8x256xbf16> to vector<8x128xbf16>
    %cst_26 = arith.constant dense<0.000000e+00> : vector<8x128xf32>
    %39 = tpu.matmul %37, %38, %cst_26 {dimension_numbers = #tpu.dot_dimension_numbers<[1], [0], [0], [1], [0, 0, 1, 1], [], []>} : vector<8x8xbf16>, vector<8x128xbf16>, vector<8x128xf32> -> vector<8x128xf32>
    %40 = arith.addf %35, %39 : vector<8x128xf32>
    %c7 = arith.constant 7 : index
    %c0_27 = arith.constant 0 : index
    %c0_28 = arith.constant 0 : index
    %41 = vector.load %arg4[%c7, %c0_27, %c0_28] : memref<9x8x8xbf16, #tpu.memory_space<vmem>>, vector<1x8x8xbf16>
    %42 = vector.shape_cast %41 : vector<1x8x8xbf16> to vector<8x8xbf16>
    %43 = vector.extract_strided_slice %4 {offsets = [0, 42], sizes = [8, 128], strides = [1, 1]} : vector<8x256xbf16> to vector<8x128xbf16>
    %cst_29 = arith.constant dense<0.000000e+00> : vector<8x128xf32>
    %44 = tpu.matmul %42, %43, %cst_29 {dimension_numbers = #tpu.dot_dimension_numbers<[1], [0], [0], [1], [0, 0, 1, 1], [], []>} : vector<8x8xbf16>, vector<8x128xbf16>, vector<8x128xf32> -> vector<8x128xf32>
    %45 = arith.addf %40, %44 : vector<8x128xf32>
    %c8 = arith.constant 8 : index
    %c0_30 = arith.constant 0 : index
    %c0_31 = arith.constant 0 : index
    %46 = vector.load %arg4[%c8, %c0_30, %c0_31] : memref<9x8x8xbf16, #tpu.memory_space<vmem>>, vector<1x8x8xbf16>
    %47 = vector.shape_cast %46 : vector<1x8x8xbf16> to vector<8x8xbf16>
    %48 = vector.extract_strided_slice %4 {offsets = [0, 43], sizes = [8, 128], strides = [1, 1]} : vector<8x256xbf16> to vector<8x128xbf16>
    %cst_32 = arith.constant dense<0.000000e+00> : vector<8x128xf32>
    %49 = tpu.matmul %47, %48, %cst_32 {dimension_numbers = #tpu.dot_dimension_numbers<[1], [0], [0], [1], [0, 0, 1, 1], [], []>} : vector<8x8xbf16>, vector<8x128xbf16>, vector<8x128xf32> -> vector<8x128xf32>
    %50 = arith.addf %45, %49 : vector<8x128xf32>
    %c0_33 = arith.constant 0 : index
    %c0_34 = arith.constant 0 : index
    %51 = vector.load %arg5[%c0_33, %c0_34] : memref<8x1xf32, #tpu.memory_space<vmem>>, vector<8x1xf32>
    %52 = vector.broadcast %51 : vector<8x1xf32> to vector<8x128xf32>
    %53 = arith.addf %50, %52 : vector<8x128xf32>
    %54 = math.tanh %53 : vector<8x128xf32>
    %c0_35 = arith.constant 0 : index
    %c0_36 = arith.constant 0 : index
    %c0_37 = arith.constant 0 : index
    %55 = vector.load %arg6[%c0_35, %c0_36, %c0_37] : memref<1x8x128xf32, #tpu.memory_space<vmem>>, vector<1x8x128xf32>
    %56 = vector.shape_cast %55 : vector<1x8x128xf32> to vector<8x128xf32>
    %57 = vector.shape_cast %54 : vector<8x128xf32> to vector<1x8x128xf32>
    tpu.vector_store %arg6[%c0_35, %c0_36, %c0_37], %57 {strides = array<i32>} : memref<1x8x128xf32, #tpu.memory_space<vmem>>, vector<1x8x128xf32>,
    return
  }
  func.func @transform_0(%arg0: i32, %arg1: i32) -> (i32, i32, i32) {
    %c0_i32 = arith.constant 0 : i32
    %c0_i32_0 = arith.constant 0 : i32
    return %arg0, %c0_i32, %arg1 : i32, i32, i32
  }
  func.func @transform_1(%arg0: i32, %arg1: i32) -> (i32, i32, i32) {
    %c1_i32 = arith.constant 1 : i32
    %0 = arith.addi %arg1, %c1_i32 : i32
    %c0_i32 = arith.constant 0 : i32
    %c0_i32_0 = arith.constant 0 : i32
    return %arg0, %c0_i32, %0 : i32, i32, i32
  }
  func.func @transform_2(%arg0: i32, %arg1: i32) -> (i32, i32, i32) {
    %c0_i32 = arith.constant 0 : i32
    %c0_i32_0 = arith.constant 0 : i32
    %c0_i32_1 = arith.constant 0 : i32
    %c0_i32_2 = arith.constant 0 : i32
    return %c0_i32, %c0_i32_0, %c0_i32_1 : i32, i32, i32
  }
  func.func @transform_3(%arg0: i32, %arg1: i32) -> (i32, i32) {
    %c0_i32 = arith.constant 0 : i32
    %c0_i32_0 = arith.constant 0 : i32
    %c0_i32_1 = arith.constant 0 : i32
    return %c0_i32, %c0_i32_0 : i32, i32
  }
  func.func @transform_4(%arg0: i32, %arg1: i32) -> (i32, i32, i32) {
    %c0_i32 = arith.constant 0 : i32
    %c0_i32_0 = arith.constant 0 : i32
    return %arg0, %c0_i32, %arg1 : i32, i32, i32
  }
}

</mosaic_0001>

<llo_original>
// kernel: torgb_forward.1
$region0: #{torgb_forward.1}
  #allocation0 [shape = 'u32[]', space=smem, size = 0x4, offset = 0x4, fixed_abs, tag = 'smem constant byte address 0x4 - core index']
  #allocation1 [shape = 'u32[72,128]{1,0:T(1,128)}', space=vmem, size = 0x9000, scoped, tag = 'internal scratch']
  %s0 = inlined_call_operand.vmem [shape: bf16[2,8,512], index: 0, kind: input, shape index: {}, may-alias: {0,1}]
  %s1 = inlined_call_operand.vmem [shape: bf16[2,8,512], index: 1, kind: input, shape index: {}, may-alias: {0,1}]
  %s2 = inlined_call_operand.vmem [shape: bf16[9,8,8], index: 2, kind: input, shape index: {}]
  %s3 = inlined_call_operand.vmem [shape: f32[8,1], index: 3, kind: input, shape index: {}]
  %s4 = inlined_call_operand.vmem [shape: f32[2,8,384], index: 4, kind: output, shape index: {}]
  %s5 = sld [smem:[#allocation0]]
  $region49: #{torgb_forward.1} parent=0
    _
  %s7 = ssub.s32 1, %s5
  %s8 = scalar_select 0, %s7, %s5
  loop: start=0, step=1, limit=8
  $region2: #{torgb_forward.1} parent=0 // loop_pre_header
    _
  $region3: #{torgb_forward.1} parent=0 // loop_header
    %s10 = sphi 0, %s14
    %p11 = scmp.ge.s32.totalorder %s10, 8
    %s17 = sphi 0, %s29
    %s18 = sphi 0, %s25
    %s19 = sphi 0, %s17
    %s20 = sphi 0, %s18
    %s21 = sphi 0, %s19
    %s22 = sphi 0, %s20
    %s34 = sphi 0, %s36
    %s37 = sphi 0, %s34
    %s38 = sphi 0, %s37
    %s54 = sphi 0, %s38
    %s64 = sphi 0, %s66
    %s67 = sphi 0, %s64
    %s68 = sphi 0, %s67
    %s84 = sphi 0, %s68
    %s88 = sphi 0, %s88
    %s90 = sphi 0, %s88
    %s91 = sphi 0, %s90
    %s105 = sphi 0, %s91
    %s109 = sphi 0, %s109
    %s111 = sphi 0, %s109
    %s112 = sphi 0, %s111
    %s126 = sphi 0, %s112
    %s134 = sphi 0, %s136
    %s137 = sphi 0, %s134
    %s138 = sphi 0, %s137
    %s154 = sphi 0, %s138
  $region4: #{torgb_forward.1} parent=0 // loop_header_branch
    %13 = sbr.rel (%p11) target = $region8
  $region5: #{torgb_forward.1} parent=0 // loop_body
    %s15 = ssub.s32 %s10, 1
    %s16 = ssub.s32 %s10, 2
    %s23 = sadd.s32 1, %s18
    %p24 = scmp.ge.s32.totalorder %s23, 3
    %s25 = scalar_select %p24, 0, %s23
    %s26 = sadd.s32 1, %s17
    %s27 = scalar_select %p24, %s26, %s17
    %p28 = scmp.ge.s32.totalorder %s27, 2
    %s29 = scalar_select %p28, 0, %s27
    %s30 = ssub.s32 %s17, %s29
    %s31 = ssub.s32 %s18, %s25
    %s32 = sor.u32 %s30, %s31
    %p33 = scmp.eq.s32.totalorder %s32, 0
    %s35 = sadd.s32 %s34, 1
    %s36 = scalar_select %p33, %s34, %s35
    %p39 = pneg %p33
    %p40 = scmp.eq.s32.totalorder %s10, 5
    %p41 = por %p39, %p40
    %p42 = scmp.ne.s32.totalorder %s34, %s37
    %p43 = scmp.eq.s32.totalorder %s10, 0
    %p44 = por %p42, %p43
    %p45 = scmp.ne.s32.totalorder %s34, %s37
    %p46 = scmp.eq.s32.totalorder %s15, 5
    %p47 = por %p45, %p46
    %p48 = scmp.ne.s32.totalorder %s37, %s38
    %p49 = scmp.eq.s32.totalorder %s15, 0
    %p50 = por %p48, %p49
    %p51 = scmp.ne.s32.totalorder %s37, %s38
    %p52 = scmp.eq.s32.totalorder %s16, 5
    %p53 = por %p51, %p52
    %p55 = scmp.ne.s32.totalorder %s38, %s54
    %p56 = scmp.eq.s32.totalorder %s16, 0
    %p57 = por %p55, %p56
    %s58 = sadd.s32 %s18, 1
    %s59 = sadd.s32 %s25, 1
    %s60 = ssub.s32 %s17, %s29
    %s61 = ssub.s32 %s58, %s59
    %s62 = sor.u32 %s60, %s61
    %p63 = scmp.eq.s32.totalorder %s62, 0
    %s65 = sadd.s32 %s64, 1
    %s66 = scalar_select %p63, %s64, %s65
    %p69 = pneg %p63
    %p70 = scmp.eq.s32.totalorder %s10, 5
    %p71 = por %p69, %p70
    %p72 = scmp.ne.s32.totalorder %s64, %s67
    %p73 = scmp.eq.s32.totalorder %s10, 0
    %p74 = por %p72, %p73
    %p75 = scmp.ne.s32.totalorder %s64, %s67
    %p76 = scmp.eq.s32.totalorder %s15, 5
    %p77 = por %p75, %p76
    %p78 = scmp.ne.s32.totalorder %s67, %s68
    %p79 = scmp.eq.s32.totalorder %s15, 0
    %p80 = por %p78, %p79
    %p81 = scmp.ne.s32.totalorder %s67, %s68
    %p82 = scmp.eq.s32.totalorder %s16, 5
    %p83 = por %p81, %p82
    %p85 = scmp.ne.s32.totalorder %s68, %s84
    %p86 = scmp.eq.s32.totalorder %s16, 0
    %p87 = por %p85, %p86
    %s89 = sadd.s32 %s88, 1
    %p92 = scmp.eq.s32.totalorder %s10, 5
    %p93 = scmp.ne.s32.totalorder %s88, %s90
    %p94 = scmp.eq.s32.totalorder %s10, 0
    %p95 = por %p93, %p94
    %p96 = scmp.ne.s32.totalorder %s88, %s90
    %p97 = scmp.eq.s32.totalorder %s15, 5
    %p98 = por %p96, %p97
    %p99 = scmp.ne.s32.totalorder %s90, %s91
    %p100 = scmp.eq.s32.totalorder %s15, 0
    %p101 = por %p99, %p100
    %p102 = scmp.ne.s32.totalorder %s90, %s91
    %p103 = scmp.eq.s32.totalorder %s16, 5
    %p104 = por %p102, %p103
    %p106 = scmp.ne.s32.totalorder %s91, %s105
    %p107 = scmp.eq.s32.totalorder %s16, 0
    %p108 = por %p106, %p107
    %s110 = sadd.s32 %s109, 1
    %p113 = scmp.eq.s32.totalorder %s10, 5
    %p114 = scmp.ne.s32.totalorder %s109, %s111
    %p115 = scmp.eq.s32.totalorder %s10, 0
    %p116 = por %p114, %p115
    %p117 = scmp.ne.s32.totalorder %s109, %s111
    %p118 = scmp.eq.s32.totalorder %s15, 5
    %p119 = por %p117, %p118
    %p120 = scmp.ne.s32.totalorder %s111, %s112
    %p121 = scmp.eq.s32.totalorder %s15, 0
    %p122 = por %p120, %p121
    %p123 = scmp.ne.s32.totalorder %s111, %s112
    %p124 = scmp.eq.s32.totalorder %s16, 5
    %p125 = por %p123, %p124
    %p127 = scmp.ne.s32.totalorder %s112, %s126
    %p128 = scmp.eq.s32.totalorder %s16, 0
    %p129 = por %p127, %p128
    %s130 = ssub.s32 %s17, %s29
    %s131 = ssub.s32 %s18, %s25
    %s132 = sor.u32 %s130, %s131
    %p133 = scmp.eq.s32.totalorder %s132, 0
    %s135 = sadd.s32 %s134, 1
    %s136 = scalar_select %p133, %s134, %s135
    %p139 = pneg %p133
    %p140 = scmp.eq.s32.totalorder %s10, 5
    %p141 = por %p139, %p140
    %p142 = scmp.ne.s32.totalorder %s134, %s137
    %p143 = scmp.eq.s32.totalorder %s10, 0
    %p144 = por %p142, %p143
    %p145 = scmp.ne.s32.totalorder %s134, %s137
    %p146 = scmp.eq.s32.totalorder %s15, 5
    %p147 = por %p145, %p146
    %p148 = scmp.ne.s32.totalorder %s137, %s138
    %p149 = scmp.eq.s32.totalorder %s15, 0
    %p150 = por %p148, %p149
    %p151 = scmp.ne.s32.totalorder %s137, %s138
    %p152 = scmp.eq.s32.totalorder %s16, 5
    %p153 = por %p151, %p152
    %p155 = scmp.ne.s32.totalorder %s138, %s154
    %p156 = scmp.eq.s32.totalorder %s16, 0
    %p157 = por %p155, %p156
    %p158 = scmp.le.s32.totalorder 1, %s10
    %p159 = scmp.lt.s32.totalorder %s10, 7
    %p160 = pnand %p158, %p159
    %p161 = pneg %p160
    // Predicated region
    $region9: #{torgb_forward.1} parent=5 // pred_check
      _
    $region10: #{torgb_forward.1} parent=5 // pred_check_branch
      %163 = sbr.rel (%p160) target = $region12
    $region11: #{torgb_forward.1} parent=5 // pred_region
      %s164 = ssub.s32 %s10, 1
      // Predicated region
      $region13: #{torgb_forward.1} parent=11 // pred_check
        %p165 = pneg %p101
      $region14: #{torgb_forward.1} parent=11 // pred_check_branch
        %167 = sbr.rel (%p165) target = $region16
      $region15: #{torgb_forward.1} parent=11 // pred_region
        _
      $region16: #{torgb_forward.1} parent=11 // pred_fallthru
        _
      // Predicated region
      $region17: #{torgb_forward.1} parent=11 // pred_check
        %p168 = pneg %p122
      $region18: #{torgb_forward.1} parent=11 // pred_check_branch
        %170 = sbr.rel (%p168) target = $region20
      $region19: #{torgb_forward.1} parent=11 // pred_region
        _
      $region20: #{torgb_forward.1} parent=11 // pred_fallthru
        _
    $region12: #{torgb_forward.1} parent=5 // pred_fallthru
      _
    %p171 = scmp.lt.s32.totalorder %s10, 6
    // Predicated region
    $region21: #{torgb_forward.1} parent=5 // pred_check
      %p172 = pneg %p171
    $region22: #{torgb_forward.1} parent=5 // pred_check_branch
      %174 = sbr.rel (%p172) target = $region24
    $region23: #{torgb_forward.1} parent=5 // pred_region
      // Predicated region
      $region25: #{torgb_forward.1} parent=23 // pred_check
        %p175 = pneg %p44
      $region26: #{torgb_forward.1} parent=23 // pred_check_branch
        %177 = sbr.rel (%p175) target = $region28
      $region27: #{torgb_forward.1} parent=23 // pred_region
        %p178 = scmp.lt.s32.totalorder %s17, 1
        %s179 = scalar_select %p178, %s17, 1
        %p180 = scmp.lt.s32.totalorder %s18, 3
        %s181 = scalar_select %p180, %s18, 3
        %s182 = smul.addr %s179, 4
        %s183 = sadd.s32 %s181, %s182
        %s184 = smul.addr %s183, 4
        %s185 = scalar_lea.vmem %s0, %s184
      $region28: #{torgb_forward.1} parent=23 // pred_fallthru
        _
      // Predicated region
      $region29: #{torgb_forward.1} parent=23 // pred_check
        %p186 = pneg %p74
      $region30: #{torgb_forward.1} parent=23 // pred_check_branch
        %188 = sbr.rel (%p186) target = $region32
      $region31: #{torgb_forward.1} parent=23 // pred_region
        %s189 = sadd.s32 %s18, 1
        %p190 = scmp.lt.s32.totalorder %s17, 1
        %s191 = scalar_select %p190, %s17, 1
        %p192 = scmp.lt.s32.totalorder %s189, 3
        %s193 = scalar_select %p192, %s189, 3
        %s194 = smul.addr %s191, 4
        %s195 = sadd.s32 %s193, %s194
        %s196 = smul.addr %s195, 4
        %s197 = scalar_lea.vmem %s1, %s196
        %s198 = sadd.s32 %s18, 1
      $region32: #{torgb_forward.1} parent=23 // pred_fallthru
        _
    $region24: #{torgb_forward.1} parent=5 // pred_fallthru
      _
    %p199 = scmp.le.s32.totalorder 1, %s10
    %p200 = scmp.lt.s32.totalorder %s10, 7
    %p201 = pnand %p199, %p200
    %p202 = pneg %p201
    // Predicated region
    $region33: #{torgb_forward.1} parent=5 // pred_check
      _
    $region34: #{torgb_forward.1} parent=5 // pred_check_branch
      %204 = sbr.rel (%p201) target = $region36
    $region35: #{torgb_forward.1} parent=5 // pred_region
      %s205 = ssub.s32 %s10, 1
      %p206 = scmp.lt.s32.totalorder %s19, 1
      %s207 = scalar_select %p206, %s19, 1
      %p208 = scmp.lt.s32.totalorder %s20, 3
      %s209 = scalar_select %p208, %s20, 3
      %s210 = smul.addr %s207, 4
      %s211 = sadd.s32 %s209, %s210
      %s212 = smul.addr %s211, 4
      %s213 = scalar_lea.vmem %s0, %s212
      %p214 = pneg %p50
      %p215 = pneg %p47
      %s216 = sadd.s32 %s20, 1
      %p217 = scmp.lt.s32.totalorder %s19, 1
      %s218 = scalar_select %p217, %s19, 1
      %p219 = scmp.lt.s32.totalorder %s216, 3
      %s220 = scalar_select %p219, %s216, 3
      %s221 = smul.addr %s218, 4
      %s222 = sadd.s32 %s220, %s221
      %s223 = smul.addr %s222, 4
      %s224 = scalar_lea.vmem %s1, %s223
      %p225 = pneg %p80
      %p226 = pneg %p77
      %p227 = pneg %p101
      %p228 = pneg %p98
      %p229 = pneg %p122
      %p230 = pneg %p119
      %p231 = pneg %p150
      %p232 = pneg %p147
      %p233 = scmp.lt.s32.totalorder %s19, 1
      %s234 = scalar_select %p233, %s19, 1
      %p235 = scmp.lt.s32.totalorder %s20, 2
      %s236 = scalar_select %p235, %s20, 2
      %s237 = smul.addr %s234, 3
      %s238 = sadd.s32 %s236, %s237
      %s239 = smul.addr %s238, 8
      %s240 = scalar_lea.vmem %s4, %s239
      %p241 = scmp.lt.s32.totalorder %s19, 1
      %s242 = scalar_select %p241, %s19, 1
      %p243 = scmp.lt.s32.totalorder %s20, 3
      %s244 = scalar_select %p243, %s20, 3
      %s245 = smul.addr %s242, 4
      %s246 = sadd.s32 %s244, %s245
      %s247 = smul.addr %s246, 4
      %s248 = scalar_lea.vmem %s0, %s247
      %s249 = sadd.s32 %s20, 1
      %p250 = scmp.lt.s32.totalorder %s19, 1
      %s251 = scalar_select %p250, %s19, 1
      %p252 = scmp.lt.s32.totalorder %s249, 3
      %s253 = scalar_select %p252, %s249, 3
      %s254 = smul.addr %s251, 4
      %s255 = sadd.s32 %s253, %s254
      %s256 = smul.addr %s255, 4
      %s257 = scalar_lea.vmem %s1, %s256
      %s258 = sadd.s32 %s20, 1
      %p259 = scmp.lt.s32.totalorder %s19, 1
      %s260 = scalar_select %p259, %s19, 1
      %p261 = scmp.lt.s32.totalorder %s20, 2
      %s262 = scalar_select %p261, %s20, 2
      %s263 = smul.addr %s260, 3
      %s264 = sadd.s32 %s262, %s263
      %s265 = smul.addr %s264, 8
      %s266 = scalar_lea.vmem %s4, %s265
      %v268 = vld [vmem:[%s248] sm:$0xf]
      %v269 = vld [vmem:[%s257] sm:$0xf]
      %v270 = vld [vmem:[%s2] sm:$0xf]
      %s271 = scalar_lea.vmem %s2, 4
      %v272 = vld [vmem:[%s271] sm:$0xf]
      %275 = vrot.lane.b32.xlu0 %v268, 122
      %v276 = vpop.permute.xlu0 %275
      %277 = vrot.lane.b32.xlu0 %v269, 122
      %v278 = vpop.permute.xlu0 %277
      %vm279 = vcmask 998400
      %v280 = vsel %vm279, %v276, %v278
      %vm281 = vcmask 64512
      %v283 = vsel %vm281, %v272, 0
      %vm285 = vcmask 1043456
      %v287 = vsel %vm285, %v280, 0
      %289 = vmatpush.bf16.msra.mxu0 0
      %290 = vmatpush.bf16.msra.mxu0 0
      %291 = vmatpush.bf16.msra.mxu0 0
      %292 = vmatpush.bf16.msra.mxu0 0
      %293 = vmatpush.bf16.msra.mxu0 0
      %294 = vmatpush.bf16.msra.mxu0 0
      %295 = vmatpush.bf16.msra.mxu0 0
      %296 = vmatpush.bf16.msra.mxu0 %v287
      %297 = vmatmul.bf16.gmra.mxu0 %v283
      %v298 = vpop.f32.mrf.mxu0
      %v299 = vadd.f32 0.0, %v298
      %v300 = vpop.f32.mrf.mxu0
      %301 = vdwg.mxu0
      %302 = vrot.lane.b32.xlu0 %v268, 123
      %v303 = vpop.permute.xlu0 %302
      %304 = vrot.lane.b32.xlu0 %v269, 123
      %v305 = vpop.permute.xlu0 %304
      %vm306 = vcmask 1006592
      %v307 = vsel %vm306, %v303, %v305
      %v309 = vsel %vm281, %v270, 0
      %v312 = vsel %vm285, %v307, 0
      %314 = vmatpush.bf16.msra.mxu0 0
      %315 = vmatpush.bf16.msra.mxu0 0
      %316 = vmatpush.bf16.msra.mxu0 0
      %317 = vmatpush.bf16.msra.mxu0 0
      %318 = vmatpush.bf16.msra.mxu0 0
      %319 = vmatpush.bf16.msra.mxu0 0
      %320 = vmatpush.bf16.msra.mxu0 0
      %321 = vmatpush.bf16.msra.mxu0 %v312
      %322 = vmatmul.bf16.gmra.mxu0 %v309
      %v323 = vpop.f32.mrf.mxu0
      %v324 = vadd.f32 %v299, %v323
      %v325 = vpop.f32.mrf.mxu0
      %326 = vdwg.mxu0
      %s327 = scalar_lea.vmem %s2, 8
      %v328 = vld [vmem:[%s327] sm:$0xf]
      %329 = vrot.lane.b32.xlu0 %v268, 121
      %v330 = vpop.permute.xlu0 %329
      %331 = vrot.lane.b32.xlu0 %v269, 121
      %v332 = vpop.permute.xlu0 %331
      %vm333 = vcmask 990208
      %v334 = vsel %vm333, %v330, %v332
      %v336 = vsel %vm281, %v328, 0
      %v339 = vsel %vm285, %v334, 0
      %341 = vmatpush.bf16.msra.mxu0 0
      %342 = vmatpush.bf16.msra.mxu0 0
      %343 = vmatpush.bf16.msra.mxu0 0
      %344 = vmatpush.bf16.msra.mxu0 0
      %345 = vmatpush.bf16.msra.mxu0 0
      %346 = vmatpush.bf16.msra.mxu0 0
      %347 = vmatpush.bf16.msra.mxu0 0
      %348 = vmatpush.bf16.msra.mxu0 %v339
      %349 = vmatmul.bf16.gmra.mxu0 %v336
      %v350 = vpop.f32.mrf.mxu0
      %v351 = vadd.f32 0.0, %v350
      %v352 = vpop.f32.mrf.mxu0
      %353 = vdwg.mxu0
      %v354 = vadd.f32 %v324, %v351
      %s355 = scalar_lea.vmem %s2, 12
      %v356 = vld [vmem:[%s355] sm:$0xf]
      %357 = vrot.lane.b32.xlu0 %v268, 105
      %v358 = vpop.permute.xlu0 %357
      %359 = vrot.lane.b32.xlu0 %v269, 105
      %v360 = vpop.permute.xlu0 %359
      %vm361 = vcmask 859136
      %v362 = vsel %vm361, %v358, %v360
      %v364 = vsel %vm281, %v356, 0
      %v367 = vsel %vm285, %v362, 0
      %369 = vmatpush.bf16.msra.mxu0 0
      %370 = vmatpush.bf16.msra.mxu0 0
      %371 = vmatpush.bf16.msra.mxu0 0
      %372 = vmatpush.bf16.msra.mxu0 0
      %373 = vmatpush.bf16.msra.mxu0 0
      %374 = vmatpush.bf16.msra.mxu0 0
      %375 = vmatpush.bf16.msra.mxu0 0
      %376 = vmatpush.bf16.msra.mxu0 %v367
      %377 = vmatmul.bf16.gmra.mxu0 %v364
      %v378 = vpop.f32.mrf.mxu0
      %v379 = vadd.f32 0.0, %v378
      %v380 = vpop.f32.mrf.mxu0
      %381 = vdwg.mxu0
      %v382 = vadd.f32 %v354, %v379
      %s383 = scalar_lea.vmem %s2, 16
      %v384 = vld [vmem:[%s383] sm:$0xf]
      %385 = vrot.lane.b32.xlu0 %v268, 104
      %v386 = vpop.permute.xlu0 %385
      %387 = vrot.lane.b32.xlu0 %v269, 104
      %v388 = vpop.permute.xlu0 %387
      %vm389 = vcmask 850944
      %v390 = vsel %vm389, %v386, %v388
      %v392 = vsel %vm281, %v384, 0
      %v395 = vsel %vm285, %v390, 0
      %397 = vmatpush.bf16.msra.mxu0 0
      %398 = vmatpush.bf16.msra.mxu0 0
      %399 = vmatpush.bf16.msra.mxu0 0
      %400 = vmatpush.bf16.msra.mxu0 0
      %401 = vmatpush.bf16.msra.mxu0 0
      %402 = vmatpush.bf16.msra.mxu0 0
      %403 = vmatpush.bf16.msra.mxu0 0
      %404 = vmatpush.bf16.msra.mxu0 %v395
      %405 = vmatmul.bf16.gmra.mxu0 %v392
      %v406 = vpop.f32.mrf.mxu0
      %v407 = vadd.f32 0.0, %v406
      %v408 = vpop.f32.mrf.mxu0
      %409 = vdwg.mxu0
      %v410 = vadd.f32 %v382, %v407
      %s411 = scalar_lea.vmem %s2, 20
      %v412 = vld [vmem:[%s411] sm:$0xf]
      %413 = vrot.lane.b32.xlu0 %v268, 103
      %v414 = vpop.permute.xlu0 %413
      %415 = vrot.lane.b32.xlu0 %v269, 103
      %v416 = vpop.permute.xlu0 %415
      %vm417 = vcmask 842752
      %v418 = vsel %vm417, %v414, %v416
      %v420 = vsel %vm281, %v412, 0
      %v423 = vsel %vm285, %v418, 0
      %425 = vmatpush.bf16.msra.mxu0 0
      %426 = vmatpush.bf16.msra.mxu0 0
      %427 = vmatpush.bf16.msra.mxu0 0
      %428 = vmatpush.bf16.msra.mxu0 0
      %429 = vmatpush.bf16.msra.mxu0 0
      %430 = vmatpush.bf16.msra.mxu0 0
      %431 = vmatpush.bf16.msra.mxu0 0
      %432 = vmatpush.bf16.msra.mxu0 %v423
      %433 = vmatmul.bf16.gmra.mxu0 %v420
      %v434 = vpop.f32.mrf.mxu0
      %v435 = vadd.f32 0.0, %v434
      %v436 = vpop.f32.mrf.mxu0
      %437 = vdwg.mxu0
      %v438 = vadd.f32 %v410, %v435
      %s439 = scalar_lea.vmem %s2, 24
      %v440 = vld [vmem:[%s439] sm:$0xf]
      %441 = vrot.lane.b32.xlu0 %v268, 87
      %v442 = vpop.permute.xlu0 %441
      %443 = vrot.lane.b32.xlu0 %v269, 87
      %v444 = vpop.permute.xlu0 %443
      %vm445 = vcmask 711680
      %v446 = vsel %vm445, %v442, %v444
      %v448 = vsel %vm281, %v440, 0
      %v451 = vsel %vm285, %v446, 0
      %453 = vmatpush.bf16.msra.mxu0 0
      %454 = vmatpush.bf16.msra.mxu0 0
      %455 = vmatpush.bf16.msra.mxu0 0
      %456 = vmatpush.bf16.msra.mxu0 0
      %457 = vmatpush.bf16.msra.mxu0 0
      %458 = vmatpush.bf16.msra.mxu0 0
      %459 = vmatpush.bf16.msra.mxu0 0
      %460 = vmatpush.bf16.msra.mxu0 %v451
      %461 = vmatmul.bf16.gmra.mxu0 %v448
      %v462 = vpop.f32.mrf.mxu0
      %v463 = vadd.f32 0.0, %v462
      %v464 = vpop.f32.mrf.mxu0
      %465 = vdwg.mxu0
      %v466 = vadd.f32 %v438, %v463
      %s467 = scalar_lea.vmem %s2, 28
      %v468 = vld [vmem:[%s467] sm:$0xf]
      %469 = vrot.lane.b32.xlu0 %v268, 86
      %v470 = vpop.permute.xlu0 %469
      %471 = vrot.lane.b32.xlu0 %v269, 86
      %v472 = vpop.permute.xlu0 %471
      %vm473 = vcmask 703488
      %v474 = vsel %vm473, %v470, %v472
      %v476 = vsel %vm281, %v468, 0
      %v479 = vsel %vm285, %v474, 0
      %481 = vmatpush.bf16.msra.mxu0 0
      %482 = vmatpush.bf16.msra.mxu0 0
      %483 = vmatpush.bf16.msra.mxu0 0
      %484 = vmatpush.bf16.msra.mxu0 0
      %485 = vmatpush.bf16.msra.mxu0 0
      %486 = vmatpush.bf16.msra.mxu0 0
      %487 = vmatpush.bf16.msra.mxu0 0
      %488 = vmatpush.bf16.msra.mxu0 %v479
      %489 = vmatmul.bf16.gmra.mxu0 %v476
      %v490 = vpop.f32.mrf.mxu0
      %v491 = vadd.f32 0.0, %v490
      %v492 = vpop.f32.mrf.mxu0
      %493 = vdwg.mxu0
      %v494 = vadd.f32 %v466, %v491
      %s495 = scalar_lea.vmem %s2, 32
      %v496 = vld [vmem:[%s495] sm:$0xf]
      %497 = vrot.lane.b32.xlu0 %v268, 85
      %v498 = vpop.permute.xlu0 %497
      %499 = vrot.lane.b32.xlu0 %v269, 85
      %v500 = vpop.permute.xlu0 %499
      %vm501 = vcmask 695296
      %v502 = vsel %vm501, %v498, %v500
      %v504 = vsel %vm281, %v496, 0
      %v507 = vsel %vm285, %v502, 0
      %509 = vmatpush.bf16.msra.mxu0 0
      %510 = vmatpush.bf16.msra.mxu0 0
      %511 = vmatpush.bf16.msra.mxu0 0
      %512 = vmatpush.bf16.msra.mxu0 0
      %513 = vmatpush.bf16.msra.mxu0 0
      %514 = vmatpush.bf16.msra.mxu0 0
      %515 = vmatpush.bf16.msra.mxu0 0
      %516 = vmatpush.bf16.msra.mxu0 %v507
      %517 = vmatmul.bf16.gmra.mxu0 %v504
      %v518 = vpop.f32.mrf.mxu0
      %v519 = vadd.f32 0.0, %v518
      %v520 = vpop.f32.mrf.mxu0
      %521 = vdwg.mxu0
      %v522 = vadd.f32 %v494, %v519
      %v523 = vld [vmem:[%s3] sm:$0xff]
      %525 = vset.pattern.permute.xlu0 0
      %526 = vperm.xlu0 %525, %v523
      %v527 = vpop.permute.xlu0 %526
      %v529 = vadd.f32 %v522, %v527
      %v530 = vtanh.pop %v529
      %531 = vst [vmem:[%s266] sm:$0xff] %v530
      %p532 = scmp.lt.s32.totalorder %s19, 1
      %s533 = scalar_select %p532, %s19, 1
      %p534 = scmp.lt.s32.totalorder %s20, 2
      %s535 = scalar_select %p534, %s20, 2
      %s536 = smul.addr %s533, 3
      %s537 = sadd.s32 %s535, %s536
      %s538 = smul.addr %s537, 8
      %s539 = scalar_lea.vmem %s4, %s538
      // Predicated region
      $region37: #{torgb_forward.1} parent=35 // pred_check
        %p540 = pneg %p147
      $region38: #{torgb_forward.1} parent=35 // pred_check_branch
        %542 = sbr.rel (%p540) target = $region40
      $region39: #{torgb_forward.1} parent=35 // pred_region
        _
      $region40: #{torgb_forward.1} parent=35 // pred_fallthru
        _
    $region36: #{torgb_forward.1} parent=5 // pred_fallthru
      _
    %p543 = scmp.le.s32.totalorder 2, %s10
    // Predicated region
    $region41: #{torgb_forward.1} parent=5 // pred_check
      %p544 = pneg %p543
    $region42: #{torgb_forward.1} parent=5 // pred_check_branch
      %546 = sbr.rel (%p544) target = $region44
    $region43: #{torgb_forward.1} parent=5 // pred_region
      %s547 = ssub.s32 %s10, 2
      // Predicated region
      $region45: #{torgb_forward.1} parent=43 // pred_check
        %p548 = pneg %p153
      $region46: #{torgb_forward.1} parent=43 // pred_check_branch
        %550 = sbr.rel (%p548) target = $region48
      $region47: #{torgb_forward.1} parent=43 // pred_region
        %p551 = scmp.lt.s32.totalorder %s21, 1
        %s552 = scalar_select %p551, %s21, 1
        %p553 = scmp.lt.s32.totalorder %s22, 2
        %s554 = scalar_select %p553, %s22, 2
        %s555 = smul.addr %s552, 3
        %s556 = sadd.s32 %s554, %s555
        %s557 = smul.addr %s556, 8
        %s558 = scalar_lea.vmem %s4, %s557
      $region48: #{torgb_forward.1} parent=43 // pred_fallthru
        _
    $region44: #{torgb_forward.1} parent=5 // pred_fallthru
      _
  $region6: #{torgb_forward.1} parent=0 // loop_footer
    %s14 = sadd.s32 1, %s10
  $region7: #{torgb_forward.1} parent=0 // loop_footer_branch
    %9 = sbr.rel target = $region3
  $region8: #{torgb_forward.1} parent=0 // loop_exit
    _

</llo_original>
